<compile_context>
chip_gen: v7x
topology: tpu7x:2x2x1
jax: 0.10.0
libtpu: 0.0.40
codegen_flags: <defaults>
</compile_context>

<pallas_src>
import jax
import jax.numpy as jnp
from jax.experimental import pallas as pl
from jax.experimental.pallas import tpu as pltpu


def _round_up(x: int, m: int) -> int:
    return (x + m - 1) // m * m


def _choose_tiling(B: int, target_tile_b: int = 8192) -> tuple[int, int]:
    """Pick (tile_b, B_pad): B padded only to a 128-lane multiple, tile_b a
    divisor of B_pad (no wasted last tile), tile_b <= target, and >= 2 grid
    steps whenever possible (v7x megacore sharding of the parallel axis)."""
    B_pad = _round_up(max(B, 1), 128)
    n = B_pad // 128                          # batch in units of 128 lanes
    max_units = min(max(target_tile_b // 128, 1), n)
    if n >= 2:                                # keep at least 2 grid steps
        max_units = min(max_units, max(n // 2, 1))
    best = 1
    for d in range(1, max_units + 1):
        if n % d == 0:
            best = d
    return 128 * best, B_pad


# ----------------------------------------------------------------------------
# Pallas kernel (one batch tile per grid step), batch-on-lanes layout.
#   xT  : (D, TB)       [states ++ signals], batch along lanes
#   w1T : (PH, D)       mask-folded first-layer weights (all predictors)
#   b1  : (PH, 1)
#   w2T : (P, PH)       block-diagonal second-layer weights
#   b2  : (P, 1)
#   yT  : (P, TB)       lane-dense output tile
# ----------------------------------------------------------------------------
def predictor_kernel(xT_ref, w1T_ref, b1_ref, w2T_ref, b2_ref, yT_ref):
    # Layer 1: (PH, D) @ (D, TB) -> (PH, TB).  K = D is tiny, so the kernel is
    # purely HBM-streaming bound; accumulate in f32.
    x = xT_ref[...].astype(w1T_ref.dtype)
    h = jnp.dot(w1T_ref[...], x, preferred_element_type=jnp.float32)
    h = jnp.tanh(h + b1_ref[...])                                # (PH, TB)

    # Layer 2: block-diagonal (P, PH) @ (PH, TB) -> (P, TB).  Output is
    # lane-dense with zero padding -> unmasked wide stores, minimal writeback.
    y = jnp.dot(w2T_ref[...], h, preferred_element_type=jnp.float32)
    yT_ref[...] = (y + b2_ref[...]).astype(yT_ref.dtype)


# ----------------------------------------------------------------------------
# Wrapper: batch-tiled pallas_call (weights resident, x double-buffered).
# ----------------------------------------------------------------------------
def predictor_forward(x_tuple, packed_params, *,
                      target_tile_b: int = 8192,
                      stream_dtype=jnp.float32):
    """x_tuple = (states (B,S), signals (B,G)); returns (B, num_predictors).

    `stream_dtype=jnp.bfloat16` halves the streamed activation bytes (the
    kernel is HBM-bound); weights and accumulation stay float32.
    """
    states, signals = x_tuple
    w1T, b1T, w2T, b2T, P = packed_params

    B, S = states.shape
    G = signals.shape[1]
    D = S + G
    PH = w1T.shape[0]

    tile_b, B_pad = _choose_tiling(B, target_tile_b)

    # One concatenated stream (negligible XLA cost), transposed so the batch
    # axis lands on lanes: (D, B_pad).
    x = jnp.concatenate([states, signals], axis=-1).astype(stream_dtype)
    if B_pad != B:
        x = jnp.pad(x, ((0, B_pad - B), (0, 0)))
    xT = x.T                                                     # (D, B_pad)

    grid = (B_pad // tile_b,)

    yT = pl.pallas_call(
        predictor_kernel,
        out_shape=jax.ShapeDtypeStruct((P, B_pad), jnp.float32),
        grid=grid,
        in_specs=[
            pl.BlockSpec((D, tile_b), lambda i: (0, i)),   # xT (batch-tiled)
            pl.BlockSpec((PH, D), lambda i: (0, 0)),       # w1T (resident)
            pl.BlockSpec((PH, 1), lambda i: (0, 0)),       # b1  (resident)
            pl.BlockSpec((P, PH), lambda i: (0, 0)),       # w2T (resident)
            pl.BlockSpec((P, 1), lambda i: (0, 0)),        # b2  (resident)
        ],
        out_specs=pl.BlockSpec((P, tile_b), lambda i: (0, i)),
        compiler_params=pltpu.CompilerParams(
            dimension_semantics=("parallel",),
        ),
    )(xT, w1T, b1T, w2T, b2T)

    # Tiny (P, B) -> (B, P) transpose in the wrapper.
    return yT[:, :B].T


# ----------------------------------------------------------------------------
# Parameter construction mirroring Predictor.__init__ (raw params), plus an
# offline "packing" step: fold the per-predictor mask into W1, flatten the
# predictor axis, and build the block-diagonal transposed layer-2 weights.
# ----------------------------------------------------------------------------
def build_params(num_states, num_signals, predictor_config, net_config, key):
    hidden = net_config['net']['hidden']
    D = num_states + num_signals
    P = len(predictor_config)

    # Per-predictor 0/1 masks over the concatenated [states, signals] feats.
    masks = []
    for _, value in predictor_config.items():
        states_idx = value['states']
        if value.get('use_latent', False):
            states_idx = list(range(num_states))
        inputs_idx = value['inputs']
        m = jnp.zeros((D,), jnp.float32)
        m = m.at[jnp.array(states_idx, jnp.int32)].set(1.0)
        m = m.at[num_states + jnp.array(inputs_idx, jnp.int32)].set(1.0)
        masks.append(m)
    mask = jnp.stack(masks, axis=0)                     # (P, D)

    k1, k2, k3, k4 = jax.random.split(key, 4)
    w1 = 0.1 * jax.random.normal(k1, (P, D, hidden), jnp.float32)
    b1 = 0.1 * jax.random.normal(k2, (P, hidden), jnp.float32)
    w2 = 0.1 * jax.random.normal(k3, (P, hidden), jnp.float32)
    b2 = 0.1 * jax.random.normal(k4, (1, P), jnp.float32)
    return mask, w1, b1, w2, b2


def pack_params(raw_params):
    """One-time offline repacking for the batch-on-lanes kernel layout."""
    mask, w1, b1, w2, b2 = raw_params
    P, D, H = w1.shape

    # Fold mask into W1 (masking x columns == zeroing corresponding W1 rows),
    # then lay the predictor*hidden axis out as rows: (P*H, D).
    w1_masked = mask[:, :, None] * w1                             # (P, D, H)
    w1T = jnp.transpose(w1_masked, (0, 2, 1)).reshape(P * H, D)   # (P*H, D)
    b1T = b1.reshape(P * H, 1)

    # Block-diagonal, transposed layer-2 weights: row p holds w2[p] in the
    # columns belonging to predictor p's hidden slab.
    w2T = jnp.zeros((P, P * H), jnp.float32)
    for p in range(P):
        w2T = w2T.at[p, p * H:(p + 1) * H].set(w2[p])
    b2T = b2.reshape(P, 1)

    return w1T, b1T, w2T, b2T, P


def reference_forward(x_tuple, raw_params):
    """Pure-JAX reference mirroring the PyTorch per-MaskedNet loop + cat."""
    states, signals = x_tuple
    x = jnp.concatenate([states, signals], axis=-1)
    mask, w1, b1, w2, b2 = raw_params
    outs = []
    for p in range(mask.shape[0]):
        xm = x * mask[p][None, :]
        h = jnp.tanh(xm @ w1[p] + b1[p][None, :])
        outs.append(h @ w2[p][:, None] + b2[0, p])      # (B, 1)
    return jnp.concatenate(outs, axis=-1)               # (B, P)


if __name__ == "__main__":
    num_states, num_signals = 4, 3
    predictor_config = {
        'p0': {'inputs': [0, 1], 'states': [0, 2]},
        'p1': {'inputs': [2],    'states': [1], 'use_latent': True},
        'p2': {'inputs': [0, 1, 2], 'states': [3]},
    }
    net_config = {'net': {'hidden': 16}}

    key = jax.random.PRNGKey(0)
    kx, ku, kp = jax.random.split(key, 3)
    B = 8
    states = jax.random.normal(kx, (B, num_states), jnp.float32)
    signals = jax.random.normal(ku, (B, num_signals), jnp.float32)

    raw_params = build_params(num_states, num_signals, predictor_config,
                              net_config, kp)
    packed = pack_params(raw_params)

    y_ref = reference_forward((states, signals), raw_params)

    # f32 streaming path.
    y = predictor_forward((states, signals), packed)
    y = jax.block_until_ready(y)
    assert y.shape == (B, len(predictor_config)), y.shape
    # f32 MXU matmuls use reduced-precision multi-pass paths -> 1e-3 tol.
    assert jnp.allclose(y, y_ref, atol=1e-3, rtol=1e-3)

    # bf16 activation-streaming path (production HBM-bound mode).
    y_bf = predictor_forward((states, signals), packed,
                             stream_dtype=jnp.bfloat16)
    y_bf = jax.block_until_ready(y_bf)
    assert jnp.allclose(y_bf, y_ref, atol=3e-2, rtol=3e-2)

    print("KERNEL_OK")
</pallas_src>

<mosaic_0001>
module attributes {stable_mosaic.version = 11 : i64} {
  func.func @predictor_kernel(%arg0: i32, %arg1: memref<7x128xf32, #tpu.memory_space<vmem>>, %arg2: memref<48x7xf32, #tpu.memory_space<vmem>>, %arg3: memref<48x1xf32, #tpu.memory_space<vmem>>, %arg4: memref<3x48xf32, #tpu.memory_space<vmem>>, %arg5: memref<3x1xf32, #tpu.memory_space<vmem>>, %arg6: memref<3x128xf32, #tpu.memory_space<vmem>>) attributes {dimension_semantics = [#tpu.dimension_semantics<parallel>], iteration_bounds = array<i64: 1>, scalar_prefetch = 0 : i64, scratch_operands = 0 : i64, tpu.core_type = #tpu.core_type<tc>, window_params = [{transform_indices = @transform_0, window_bounds = array<i64: 7, 128>}, {pipeline_mode = #tpu.pipeline_mode<synchronous>, transform_indices = @transform_1, window_bounds = array<i64: 48, 7>}, {pipeline_mode = #tpu.pipeline_mode<synchronous>, transform_indices = @transform_2, window_bounds = array<i64: 48, 1>}, {pipeline_mode = #tpu.pipeline_mode<synchronous>, transform_indices = @transform_3, window_bounds = array<i64: 3, 48>}, {pipeline_mode = #tpu.pipeline_mode<synchronous>, transform_indices = @transform_4, window_bounds = array<i64: 3, 1>}, {transform_indices = @transform_5, window_bounds = array<i64: 3, 128>}]} {
    %c0 = arith.constant 0 : index
    %c0_0 = arith.constant 0 : index
    %0 = vector.load %arg1[%c0, %c0_0] : memref<7x128xf32, #tpu.memory_space<vmem>>, vector<7x128xf32>
    %c0_1 = arith.constant 0 : index
    %c0_2 = arith.constant 0 : index
    %1 = vector.load %arg2[%c0_1, %c0_2] : memref<48x7xf32, #tpu.memory_space<vmem>>, vector<48x7xf32>
    %cst = arith.constant dense<0.000000e+00> : vector<48x128xf32>
    %2 = tpu.matmul %1, %0, %cst {dimension_numbers = #tpu.dot_dimension_numbers<[1], [0], [0], [1], [0, 0, 1, 1], [], []>} : vector<48x7xf32>, vector<7x128xf32>, vector<48x128xf32> -> vector<48x128xf32>
    %c0_3 = arith.constant 0 : index
    %c0_4 = arith.constant 0 : index
    %3 = vector.load %arg3[%c0_3, %c0_4] : memref<48x1xf32, #tpu.memory_space<vmem>>, vector<48x1xf32>
    %4 = vector.broadcast %3 : vector<48x1xf32> to vector<48x128xf32>
    %5 = arith.addf %2, %4 : vector<48x128xf32>
    %6 = math.tanh %5 : vector<48x128xf32>
    %c0_5 = arith.constant 0 : index
    %c0_6 = arith.constant 0 : index
    %7 = vector.load %arg4[%c0_5, %c0_6] : memref<3x48xf32, #tpu.memory_space<vmem>>, vector<3x48xf32>
    %cst_7 = arith.constant dense<0.000000e+00> : vector<3x128xf32>
    %8 = tpu.matmul %7, %6, %cst_7 {dimension_numbers = #tpu.dot_dimension_numbers<[1], [0], [0], [1], [0, 0, 1, 1], [], []>} : vector<3x48xf32>, vector<48x128xf32>, vector<3x128xf32> -> vector<3x128xf32>
    %c0_8 = arith.constant 0 : index
    %c0_9 = arith.constant 0 : index
    %9 = vector.load %arg5[%c0_8, %c0_9] : memref<3x1xf32, #tpu.memory_space<vmem>>, vector<3x1xf32>
    %10 = vector.broadcast %9 : vector<3x1xf32> to vector<3x128xf32>
    %11 = arith.addf %8, %10 : vector<3x128xf32>
    %c0_10 = arith.constant 0 : index
    %c0_11 = arith.constant 0 : index
    %12 = vector.load %arg6[%c0_10, %c0_11] : memref<3x128xf32, #tpu.memory_space<vmem>>, vector<3x128xf32>
    tpu.vector_store %arg6[%c0_10, %c0_11], %11 {strides = array<i32>} : memref<3x128xf32, #tpu.memory_space<vmem>>, vector<3x128xf32>,
    return
  }
  func.func @transform_0(%arg0: i32) -> (i32, i32) {
    %c0_i32 = arith.constant 0 : i32
    %c0_i32_0 = arith.constant 0 : i32
    return %c0_i32, %arg0 : i32, i32
  }
  func.func @transform_1(%arg0: i32) -> (i32, i32) {
    %c0_i32 = arith.constant 0 : i32
    %c0_i32_0 = arith.constant 0 : i32
    %c0_i32_1 = arith.constant 0 : i32
    return %c0_i32, %c0_i32_0 : i32, i32
  }
  func.func @transform_2(%arg0: i32) -> (i32, i32) {
    %c0_i32 = arith.constant 0 : i32
    %c0_i32_0 = arith.constant 0 : i32
    %c0_i32_1 = arith.constant 0 : i32
    return %c0_i32, %c0_i32_0 : i32, i32
  }
  func.func @transform_3(%arg0: i32) -> (i32, i32) {
    %c0_i32 = arith.constant 0 : i32
    %c0_i32_0 = arith.constant 0 : i32
    %c0_i32_1 = arith.constant 0 : i32
    return %c0_i32, %c0_i32_0 : i32, i32
  }
  func.func @transform_4(%arg0: i32) -> (i32, i32) {
    %c0_i32 = arith.constant 0 : i32
    %c0_i32_0 = arith.constant 0 : i32
    %c0_i32_1 = arith.constant 0 : i32
    return %c0_i32, %c0_i32_0 : i32, i32
  }
  func.func @transform_5(%arg0: i32) -> (i32, i32) {
    %c0_i32 = arith.constant 0 : i32
    %c0_i32_0 = arith.constant 0 : i32
    return %c0_i32, %arg0 : i32, i32
  }
}

</mosaic_0001>

<llo_original>
// kernel: tpu_custom_call.1
$region0: #{tpu_custom_call.1}
  #allocation0 [shape = 'u32[]', space=smem, size = 0x4, offset = 0x4, fixed_abs, tag = 'smem constant byte address 0x4 - core index']
  #allocation1 [shape = 'u32[144,128]{1,0:T(1,128)}', space=vmem, size = 0x12000, scoped, tag = 'internal scratch']
  %s0 = inlined_call_operand.vmem [shape: f32[7,128], index: 0, kind: input, shape index: {}]
  %s1 = inlined_call_operand.vmem [shape: f32[48,7], index: 1, kind: input, shape index: {}]
  %s2 = inlined_call_operand.vmem [shape: f32[48,1], index: 2, kind: input, shape index: {}]
  %s3 = inlined_call_operand.vmem [shape: f32[3,48], index: 3, kind: input, shape index: {}]
  %s4 = inlined_call_operand.vmem [shape: f32[3,1], index: 4, kind: input, shape index: {}]
  %s5 = inlined_call_operand.hbm [shape: f32[3,128], index: 5, kind: output, shape index: {}]
  %s6 = sld [smem:[#allocation0]]
  $region30: #{tpu_custom_call.1} parent=0
    _
  %s8 = ssub.s32 1, %s6
  %s9 = scalar_select 0, %s8, %s6
  $region1: #{tpu_custom_call.1} parent=0
    #allocation2 [shape = 'u8[2048]{0}', space=vmem, size = 0x800, scoped, tag = 'output window, operand 0, single buffered']
    #allocation3 [shape = 's32[1]{0}', space=sflag, size = 0x4, scoped, tag = 'scoped memory for tpu_custom_call.1']
    %10 = vsyncpa [#allocation3], 0
    // Predicated region
    $region2: #{tpu_custom_call.1} parent=1 // pred_check
      _
    $region3: #{tpu_custom_call.1} parent=1 // pred_check_branch
      %12 = sbr.rel (0) target = $region5
    $region4: #{tpu_custom_call.1} parent=1 // pred_region
      _
    $region5: #{tpu_custom_call.1} parent=1 // pred_fallthru
      _
    // Predicated region
    $region6: #{tpu_custom_call.1} parent=1 // pred_check
      _
    $region7: #{tpu_custom_call.1} parent=1 // pred_check_branch
      %14 = sbr.rel (0) target = $region9
    $region8: #{tpu_custom_call.1} parent=1 // pred_region
      _
    $region9: #{tpu_custom_call.1} parent=1 // pred_fallthru
      _
    // Predicated region
    $region10: #{tpu_custom_call.1} parent=1 // pred_check
      _
    $region11: #{tpu_custom_call.1} parent=1 // pred_check_branch
      %16 = sbr.rel (0) target = $region13
    $region12: #{tpu_custom_call.1} parent=1 // pred_region
      _
    $region13: #{tpu_custom_call.1} parent=1 // pred_fallthru
      _
    // Predicated region
    $region14: #{tpu_custom_call.1} parent=1 // pred_check
      _
    $region15: #{tpu_custom_call.1} parent=1 // pred_check_branch
      %18 = sbr.rel (0) target = $region17
    $region16: #{tpu_custom_call.1} parent=1 // pred_region
      _
    $region17: #{tpu_custom_call.1} parent=1 // pred_fallthru
      _
    // Predicated region
    $region18: #{tpu_custom_call.1} parent=1 // pred_check
      _
    $region19: #{tpu_custom_call.1} parent=1 // pred_check_branch
      %20 = sbr.rel (0) target = $region21
    $region20: #{tpu_custom_call.1} parent=1 // pred_region
      _
    $region21: #{tpu_custom_call.1} parent=1 // pred_fallthru
      _
    %v21 = vld [vmem:[%s0] sm:$0x7f]
    %v22 = vld [vmem:[%s1] sm:$0xff]
    %v23 = vld [vmem:[%s1 + $0x8] sm:$0xff]
    %v24 = vld [vmem:[%s1 + $0x10] sm:$0xff]
    %v25 = vld [vmem:[%s1 + $0x18] sm:$0xff]
    %v26 = vld [vmem:[%s1 + $0x20] sm:$0xff]
    %v27 = vld [vmem:[%s1 + $0x28] sm:$0xff]
    %v28 = vld [vmem:[%s2] sm:$0xff]
    %v29 = vld [vmem:[%s2 + $0x8] sm:$0xff]
    %v30 = vld [vmem:[%s2 + $0x10] sm:$0xff]
    %v31 = vld [vmem:[%s2 + $0x18] sm:$0xff]
    %v32 = vld [vmem:[%s2 + $0x20] sm:$0xff]
    %v33 = vld [vmem:[%s2 + $0x28] sm:$0xff]
    %35 = vset.pattern.permute.xlu0 0
    %36 = vperm.xlu0 %35, %v28
    %v37 = vpop.permute.xlu0 %36
    %40 = vset.pattern.permute.xlu0 0
    %41 = vperm.xlu0 %40, %v29
    %v42 = vpop.permute.xlu0 %41
    %45 = vset.pattern.permute.xlu0 0
    %46 = vperm.xlu0 %45, %v30
    %v47 = vpop.permute.xlu0 %46
    %50 = vset.pattern.permute.xlu0 0
    %51 = vperm.xlu0 %50, %v31
    %v52 = vpop.permute.xlu0 %51
    %55 = vset.pattern.permute.xlu0 0
    %56 = vperm.xlu0 %55, %v32
    %v57 = vpop.permute.xlu0 %56
    %60 = vset.pattern.permute.xlu0 0
    %61 = vperm.xlu0 %60, %v33
    %v62 = vpop.permute.xlu0 %61
    %vm64 = vcmask 56320
    %v66 = vsel %vm64, %v22, 0
    %v69 = vsel %vm64, %v23, 0
    %v72 = vsel %vm64, %v24, 0
    %v75 = vsel %vm64, %v25, 0
    %v78 = vsel %vm64, %v26, 0
    %v81 = vsel %vm64, %v27, 0
    %vm83 = vcmask 1046528
    %v85 = vsel %vm83, %v21, 0
    %87 = vmatprep.subr.mxu0 0.0
    %88 = vmatpush1.msra.mxu0 %v85
    %89 = vmatprep.subr.mxu0 0.0
    %90 = vmatpush1.msra.mxu0 0.0
    %91 = vmatprep.subr.mxu0 0.0
    %92 = vmatpush1.msra.mxu0 0.0
    %93 = vmatprep.subr.mxu0 0.0
    %94 = vmatpush1.msra.mxu0 0.0
    %95 = vmatprep.subr.mxu0 0.0
    %96 = vmatpush1.msra.mxu0 0.0
    %97 = vmatprep.subr.mxu0 0.0
    %98 = vmatpush1.msra.mxu0 0.0
    %99 = vmatprep.subr.mxu0 0.0
    %100 = vmatpush1.msra.mxu0 0.0
    %101 = vmatprep.subr.mxu0 0.0
    %102 = vmatpush1.msra.mxu0 0.0
    %103 = vmatprep.subr.mxu0 0.0
    %104 = vmatpush1.msra.mxu0 0.0
    %105 = vmatprep.subr.mxu0 0.0
    %106 = vmatpush1.msra.mxu0 0.0
    %107 = vmatprep.subr.mxu0 0.0
    %108 = vmatpush1.msra.mxu0 0.0
    %109 = vmatprep.subr.mxu0 0.0
    %110 = vmatpush1.msra.mxu0 0.0
    %111 = vmatprep.subr.mxu0 0.0
    %112 = vmatpush1.msra.mxu0 0.0
    %113 = vmatprep.subr.mxu0 0.0
    %114 = vmatpush1.msra.mxu0 0.0
    %115 = vmatprep.subr.mxu0 0.0
    %116 = vmatpush1.msra.mxu0 0.0
    %117 = vmatprep.subr.mxu0 0.0
    %118 = vmatpush1.msra.mxu0 0.0
    %119 = vmatprep.subr.mxu0 0.0
    %120 = vmatpush1.msra.mxu0 0.0
    %121 = vmatprep.subr.mxu0 0.0
    %122 = vmatpush1.msra.mxu0 0.0
    %123 = vmatprep.subr.mxu0 0.0
    %124 = vmatpush1.msra.mxu0 0.0
    %125 = vmatprep.subr.mxu0 0.0
    %126 = vmatpush1.msra.mxu0 0.0
    %127 = vmatprep.subr.mxu0 0.0
    %128 = vmatpush1.msra.mxu0 0.0
    %129 = vmatprep.subr.mxu0 0.0
    %130 = vmatpush1.msra.mxu0 0.0
    %131 = vmatprep.subr.mxu0 0.0
    %132 = vmatpush1.msra.mxu0 0.0
    %133 = vmatprep.subr.mxu0 0.0
    %134 = vmatpush1.msra.mxu0 0.0
    %135 = vmatprep.subr.mxu0 0.0
    %136 = vmatpush1.msra.mxu0 0.0
    %137 = vmatprep.subr.mxu0 0.0
    %138 = vmatpush1.msra.mxu0 0.0
    %139 = vmatprep.subr.mxu0 0.0
    %140 = vmatpush1.msra.mxu0 0.0
    %141 = vmatprep.subr.mxu0 0.0
    %142 = vmatpush1.msra.mxu0 0.0
    %143 = vmatprep.subr.mxu0 0.0
    %144 = vmatpush1.msra.mxu0 0.0
    %145 = vmatprep.subr.mxu0 0.0
    %146 = vmatpush1.msra.mxu0 0.0
    %147 = vmatprep.subr.mxu0 0.0
    %148 = vmatpush1.msra.mxu0 0.0
    %149 = vmatprep.subr.mxu0 0.0
    %150 = vmatpush1.msra.mxu0 0.0
    %151 = vmatprep.mubr.f32.mxu0 0.0
    %152 = vmatmul.mubr.f32.gmra.mrb[0].mxu0 %v66
    %v153 = vpop.f32.mrb[0].mxu0
    %v154 = vadd.f32 %v37, %v153
    %v155 = vpop.f32.mrb[0].mxu0
    %156 = vmatprep.mubr.f32.mxu0 0.0
    %157 = vmatmul.mubr.f32.gmra.mrb[0].mxu0 %v69
    %v158 = vpop.f32.mrb[0].mxu0
    %v159 = vadd.f32 %v42, %v158
    %v160 = vpop.f32.mrb[0].mxu0
    %161 = vmatprep.mubr.f32.mxu0 0.0
    %162 = vmatmul.mubr.f32.gmra.mrb[0].mxu0 %v72
    %v163 = vpop.f32.mrb[0].mxu0
    %v164 = vadd.f32 %v47, %v163
    %v165 = vpop.f32.mrb[0].mxu0
    %166 = vmatprep.mubr.f32.mxu0 0.0
    %167 = vmatmul.mubr.f32.gmra.mrb[0].mxu0 %v75
    %v168 = vpop.f32.mrb[0].mxu0
    %v169 = vadd.f32 %v52, %v168
    %v170 = vpop.f32.mrb[0].mxu0
    %171 = vmatprep.mubr.f32.mxu0 0.0
    %172 = vmatmul.mubr.f32.gmra.mrb[0].mxu0 %v78
    %v173 = vpop.f32.mrb[0].mxu0
    %v174 = vadd.f32 %v57, %v173
    %v175 = vpop.f32.mrb[0].mxu0
    %176 = vmatprep.mubr.f32.mxu0 0.0
    %177 = vmatmul.mubr.f32.gmra.mrb[0].mxu0 %v81
    %v178 = vpop.f32.mrb[0].mxu0
    %v179 = vadd.f32 %v62, %v178
    %v180 = vpop.f32.mrb[0].mxu0
    %181 = vdwg.mxu0
    %v182 = vtanh.pop %v154
    %v183 = vtanh.pop %v159
    %v184 = vtanh.pop %v164
    %v185 = vtanh.pop %v169
    %v186 = vtanh.pop %v174
    %v187 = vtanh.pop %v179
    %v188 = vld [vmem:[%s3] sm:$0x7]
    %v189 = vld [vmem:[%s4] sm:$0x7]
    %191 = vset.pattern.permute.xlu0 0
    %192 = vperm.xlu0 %191, %v189
    %v193 = vpop.permute.xlu0 %192
    %vm195 = vcmask 392192
    %v197 = vsel %vm195, %v188, 0
    %199 = vmatprep.subr.mxu0 0.0
    %200 = vmatpush1.msra.mxu0 %v182
    %201 = vmatprep.subr.mxu0 0.0
    %202 = vmatpush1.msra.mxu0 %v183
    %203 = vmatprep.subr.mxu0 0.0
    %204 = vmatpush1.msra.mxu0 %v184
    %205 = vmatprep.subr.mxu0 0.0
    %206 = vmatpush1.msra.mxu0 %v185
    %207 = vmatprep.subr.mxu0 0.0
    %208 = vmatpush1.msra.mxu0 %v186
    %209 = vmatprep.subr.mxu0 0.0
    %210 = vmatpush1.msra.mxu0 %v187
    %211 = vmatprep.subr.mxu0 0.0
    %212 = vmatpush1.msra.mxu0 0.0
    %213 = vmatprep.subr.mxu0 0.0
    %214 = vmatpush1.msra.mxu0 0.0
    %215 = vmatprep.subr.mxu0 0.0
    %216 = vmatpush1.msra.mxu0 0.0
    %217 = vmatprep.subr.mxu0 0.0
    %218 = vmatpush1.msra.mxu0 0.0
    %219 = vmatprep.subr.mxu0 0.0
    %220 = vmatpush1.msra.mxu0 0.0
    %221 = vmatprep.subr.mxu0 0.0
    %222 = vmatpush1.msra.mxu0 0.0
    %223 = vmatprep.subr.mxu0 0.0
    %224 = vmatpush1.msra.mxu0 0.0
    %225 = vmatprep.subr.mxu0 0.0
    %226 = vmatpush1.msra.mxu0 0.0
    %227 = vmatprep.subr.mxu0 0.0
    %228 = vmatpush1.msra.mxu0 0.0
    %229 = vmatprep.subr.mxu0 0.0
    %230 = vmatpush1.msra.mxu0 0.0
    %231 = vmatprep.subr.mxu0 0.0
    %232 = vmatpush1.msra.mxu0 0.0
    %233 = vmatprep.subr.mxu0 0.0
    %234 = vmatpush1.msra.mxu0 0.0
    %235 = vmatprep.subr.mxu0 0.0
    %236 = vmatpush1.msra.mxu0 0.0
    %237 = vmatprep.subr.mxu0 0.0
    %238 = vmatpush1.msra.mxu0 0.0
    %239 = vmatprep.subr.mxu0 0.0
    %240 = vmatpush1.msra.mxu0 0.0
    %241 = vmatprep.subr.mxu0 0.0
    %242 = vmatpush1.msra.mxu0 0.0
    %243 = vmatprep.subr.mxu0 0.0
    %244 = vmatpush1.msra.mxu0 0.0
    %245 = vmatprep.subr.mxu0 0.0
    %246 = vmatpush1.msra.mxu0 0.0
    %247 = vmatprep.subr.mxu0 0.0
    %248 = vmatpush1.msra.mxu0 0.0
    %249 = vmatprep.subr.mxu0 0.0
    %250 = vmatpush1.msra.mxu0 0.0
    %251 = vmatprep.subr.mxu0 0.0
    %252 = vmatpush1.msra.mxu0 0.0
    %253 = vmatprep.subr.mxu0 0.0
    %254 = vmatpush1.msra.mxu0 0.0
    %255 = vmatprep.subr.mxu0 0.0
    %256 = vmatpush1.msra.mxu0 0.0
    %257 = vmatprep.subr.mxu0 0.0
    %258 = vmatpush1.msra.mxu0 0.0
    %259 = vmatprep.subr.mxu0 0.0
    %260 = vmatpush1.msra.mxu0 0.0
    %261 = vmatprep.subr.mxu0 0.0
    %262 = vmatpush1.msra.mxu0 0.0
    %263 = vmatprep.mubr.f32.mxu0 0.0
    %264 = vmatmul.mubr.f32.gmra.mrb[0].mxu0 %v197
    %v265 = vpop.f32.mrb[0].mxu0
    %v266 = vadd.f32 %v193, %v265
    %v267 = vpop.f32.mrb[0].mxu0
    %268 = vdwg.mxu0
    %269 = vst [vmem:[#allocation2] sm:$0x7] %v266
    // Predicated region
    $region22: #{tpu_custom_call.1} parent=1 // pred_check
      _
    $region23: #{tpu_custom_call.1} parent=1 // pred_check_branch
      %271 = sbr.rel (0) target = $region25
    $region24: #{tpu_custom_call.1} parent=1 // pred_region
      %s273 = ssub.s32 64, 64
      %274 = vsyncadd [#allocation3], %s273
      %s276 = sshll.u32 [#allocation2], 4
      %s277 = int_to_ptr.vmem [resolvable:$true] %s276
      %279 = dma.vmem_to_hbm [thread:$0]  %s277, 64, %s5, [#allocation3]
    $region25: #{tpu_custom_call.1} parent=1 // pred_fallthru
      _
    // Predicated region
    $region26: #{tpu_custom_call.1} parent=1 // pred_check
      _
    $region27: #{tpu_custom_call.1} parent=1 // pred_check_branch
      %281 = sbr.rel (0) target = $region29
    $region28: #{tpu_custom_call.1} parent=1 // pred_region
      %282 = dma.done [#allocation3], 64
    $region29: #{tpu_custom_call.1} parent=1 // pred_fallthru
      _
    %283 = vsyncpa [#allocation3], 1

</llo_original>
